<compile_context>
chip_gen: v6e
topology: v6e:2x2x1
jax: 0.10.0
libtpu: 0.0.40
codegen_flags: <defaults>
</compile_context>

<pallas_src>
import jax
import jax.numpy as jnp
from jax.experimental import pallas as pl
from jax.experimental.pallas import tpu as pltpu


def _round_up(x, m):
    return (x + m - 1) // m * m


def _make_kernel(T, D, max_fs, dims):
    CAT, C, P, NCP = dims      # n_fs*NF, cnn_output_dim, project_output_dim, padded out lanes

    def kernel(x_ref, wbig_ref, tmask_ref, wd_ref, b_ref, out_ref):
        tb = x_ref.shape[0]
        # feats may be streamed as bf16 (halves HBM bytes on v5e/v6e/v7x);
        # all in-kernel VPU/EUP math stays in f32.
        x = x_ref[...].astype(jnp.float32)                      # (tb, T, D)

        # ---- im2col along time: x_win[:, t, dt*D:(dt+1)*D] = x[:, t+dt, :] ---
        # Trailing rows shifted past T are zero-filled; they only feed the
        # per-branch invalid region which is masked to -1e30 before the pool.
        cols = [x]
        for dt in range(1, max_fs):
            cols.append(jnp.concatenate(
                [x[:, dt:, :], jnp.zeros((tb, dt, D), jnp.float32)], axis=1))
        x_win = jnp.concatenate(cols, axis=-1)                   # (tb, T, max_fs*D)

        # ---- ONE flat 2-D MXU pass: all branches, all taps, cat-ordered -----
        x2 = x_win.reshape(tb * T, max_fs * D)                   # T % 8 == 0 -> no relayout
        y2 = jnp.dot(x2, wbig_ref[...], preferred_element_type=jnp.float32)
        conv = y2.reshape(tb, T, CAT)                            # (tb, T, CAT)

        # ---- masked time max-pool, then conv bias + ReLU ---------------------
        # Valid (bias+ReLU after max) only because the conv bias is per-channel
        # and constant over time: max_t ReLU(conv+b) == ReLU(max_t conv + b).
        pooled = jnp.max(conv + tmask_ref[...][None, :, :], axis=1)   # (tb, CAT)
        bias = b_ref[...]                                        # (4, Lmax)
        cat = jnp.maximum(pooled + bias[0:1, :CAT], 0.0)
        # dropout on cat / project dropout: identity (eval mode)

        # ---- fc -> ReLU -> project -> ReLU -> classify (3 small MXU passes) --
        wd = wd_ref[...]                                         # (3, Rmax, Cmax)
        h = jnp.dot(cat, wd[0, :CAT, :C], preferred_element_type=jnp.float32)
        h = jnp.maximum(h + bias[1:2, :C], 0.0)                  # cnn_block ReLU
        h = jnp.dot(h, wd[1, :C, :P], preferred_element_type=jnp.float32)
        h = jnp.maximum(h + bias[2:3, :P], 0.0)                  # project ReLU
        logits = jnp.dot(h, wd[2, :P, :NCP], preferred_element_type=jnp.float32)
        logits = logits + bias[3:4, :NCP]

        # exact sigmoid (the approx EUP reciprocal broke the 1e-3 check);
        # padded lanes hold sigmoid(0)=0.5 and are sliced away in the wrapper.
        out_ref[...] = (1.0 / (1.0 + jnp.exp(-logits))).astype(out_ref.dtype)

    return kernel


def _pack_params(params, filter_sizes, out_lanes=128):
    """Host-side packing of the parameter tensors into 3 lane-friendly arrays."""
    fs_list = tuple(filter_sizes)
    NF = params["conv_w0"].shape[-1]
    D = params["conv_w0"].shape[1]
    n_fs = len(fs_list)
    max_fs = max(fs_list)
    CAT = n_fs * NF

    # W_big: (max_fs*D, CAT).  Branch i owns lane block [i*NF, (i+1)*NF); its
    # tap dt occupies contraction rows [dt*D, (dt+1)*D) (zeros for dt >= fs_i),
    # so x_win @ W_big yields torch.cat-ordered conv outputs summed over taps.
    w_big = jnp.zeros((max_fs * D, CAT), jnp.float32)
    conv_b = jnp.zeros((CAT,), jnp.float32)
    for i, fs in enumerate(fs_list):
        w = params[f"conv_w{i}"]                          # (fs, D, NF)
        for dt in range(fs):
            w_big = w_big.at[dt * D:(dt + 1) * D, i * NF:(i + 1) * NF].set(w[dt])
        conv_b = conv_b.at[i * NF:(i + 1) * NF].set(params[f"conv_b{i}"].reshape(NF))

    fc_w, pw, cw = params["fc_w"], params["pw"], params["cw"]
    assert fc_w.shape[0] == CAT
    C, P, NC = fc_w.shape[1], pw.shape[1], cw.shape[1]

    NCP = max(out_lanes, NC)                              # lane-dense padded logits width
    rmax, cmax = max(CAT, C, P), max(C, P, NCP)
    wd = jnp.zeros((3, rmax, cmax), jnp.float32)
    wd = wd.at[0, :CAT, :C].set(fc_w)
    wd = wd.at[1, :C, :P].set(pw)
    wd = wd.at[2, :P, :NC].set(cw)

    lmax = max(CAT, C, P, NCP)
    biases = jnp.zeros((4, lmax), jnp.float32)
    biases = biases.at[0, :CAT].set(conv_b)
    biases = biases.at[1, :C].set(params["fc_b"].reshape(C))
    biases = biases.at[2, :P].set(params["pb"].reshape(P))
    biases = biases.at[3, :NC].set(params["cb"].reshape(NC))
    return w_big, wd, biases, (CAT, C, P, NC, NCP, max_fs)


def _time_mask(T, filter_sizes, n_filters, neg=-1e30):
    """(T, CAT) additive mask: 0 on valid conv rows, -1e30 past each branch's t_out."""
    CAT = len(filter_sizes) * n_filters
    m = jnp.zeros((T, CAT), jnp.float32)
    t = jnp.arange(T)[:, None]
    for i, fs in enumerate(filter_sizes):
        t_out = T - fs + 1
        col = jnp.where(t < t_out, 0.0, neg).astype(jnp.float32)     # (T, 1)
        m = m.at[:, i * n_filters:(i + 1) * n_filters].set(
            jnp.broadcast_to(col, (T, n_filters)))
    return m


def one_actor_forward(feats, params, filter_sizes, *, tile_b=512, out_lanes=128):
    """Pallas implementation of OneActorOneModalityBrute.forward (eval mode)."""
    B, T, D = feats.shape
    assert T >= max(filter_sizes), "sequence shorter than the largest conv filter"
    NF = params["conv_w0"].shape[-1]

    w_big, wd, biases, (CAT, C, P, NC, NCP, max_fs) = _pack_params(
        params, filter_sizes, out_lanes)
    tmask = _time_mask(T, filter_sizes, NF)

    # Sublane-friendly batch tiling: TILE_B % 8 == 0, batch padded to a multiple.
    tb = min(_round_up(tile_b, 8), _round_up(B, 8))
    B_pad = _round_up(B, tb)
    if B_pad != B:
        feats = jnp.concatenate(
            [feats, jnp.zeros((B_pad - B, T, D), feats.dtype)], axis=0)
    grid = (B_pad // tb,)

    flops = 2 * B_pad * T * (max_fs * D) * CAT + 2 * B_pad * (CAT * C + C * P + P * NCP)
    bytes_accessed = (int(feats.size) * feats.dtype.itemsize
                      + 4 * int(w_big.size + wd.size + biases.size + tmask.size)
                      + 4 * B_pad * NCP)

    out = pl.pallas_call(
        _make_kernel(T, D, max_fs, (CAT, C, P, NCP)),
        out_shape=jax.ShapeDtypeStruct((B_pad, NCP), jnp.float32),
        grid=grid,
        in_specs=[
            # feats: the only streamed operand, auto double-buffered per batch tile
            pl.BlockSpec((tb, T, D), lambda b: (b, 0, 0)),
            # packed weights / mask / biases: constant block index -> DMA'd once, resident
            pl.BlockSpec((max_fs * D, CAT), lambda b: (0, 0)),
            pl.BlockSpec((T, CAT), lambda b: (0, 0)),
            pl.BlockSpec(wd.shape, lambda b: (0, 0, 0)),
            pl.BlockSpec(biases.shape, lambda b: (0, 0)),
        ],
        out_specs=pl.BlockSpec((tb, NCP), lambda b: (b, 0)),     # lane-dense store
        compiler_params=pltpu.CompilerParams(
            dimension_semantics=("parallel",)),                  # v7x: 2 TCs split the batch
        cost_estimate=pl.CostEstimate(
            flops=int(flops), transcendentals=int(B_pad * NCP),
            bytes_accessed=int(bytes_accessed)),
    )(feats, w_big, tmask, wd, biases)

    out = out[:B, :NC]
    # second return value of the PyTorch module is the constant [[0, 0, 0]]
    return out, jnp.zeros((1, 3), jnp.float32)


def init_params(key, input_dim, n_filters, filter_sizes, cnn_output_dim,
                project_output_dim, num_classes):
    """Deterministic synthetic parameter init (already transposed for x @ W)."""
    n_fs = len(filter_sizes)
    keys = jax.random.split(key, 2 * n_fs + 6)
    params = {}
    k = 0
    for i, fs in enumerate(filter_sizes):
        params[f"conv_w{i}"] = 0.1 * jax.random.normal(
            keys[k], (fs, input_dim, n_filters), jnp.float32); k += 1
        params[f"conv_b{i}"] = 0.1 * jax.random.normal(
            keys[k], (1, n_filters), jnp.float32); k += 1
    params["fc_w"] = 0.1 * jax.random.normal(
        keys[k], (n_fs * n_filters, cnn_output_dim), jnp.float32); k += 1
    params["fc_b"] = 0.1 * jax.random.normal(
        keys[k], (1, cnn_output_dim), jnp.float32); k += 1
    params["pw"] = 0.1 * jax.random.normal(
        keys[k], (cnn_output_dim, project_output_dim), jnp.float32); k += 1
    params["pb"] = 0.1 * jax.random.normal(
        keys[k], (1, project_output_dim), jnp.float32); k += 1
    params["cw"] = 0.1 * jax.random.normal(
        keys[k], (project_output_dim, num_classes), jnp.float32); k += 1
    params["cb"] = 0.1 * jax.random.normal(
        keys[k], (1, num_classes), jnp.float32); k += 1
    return params


def reference(feats, params, filter_sizes):
    """Pure-JAX reference of the same forward pass (eval mode)."""
    x = feats
    pooled = []
    for i, fs in enumerate(filter_sizes):
        w = params[f"conv_w{i}"]                              # (fs, D, F)
        b = params[f"conv_b{i}"]                              # (1, F)
        t_out = x.shape[1] - fs + 1
        windows = jnp.stack([x[:, dt:dt + t_out, :] for dt in range(fs)], axis=0)
        conv = jnp.einsum("sbtd,sdf->btf", windows, w) + b
        conv = jax.nn.relu(conv)
        pooled.append(jnp.max(conv, axis=1))
    cat = jnp.concatenate(pooled, axis=-1)
    h = jax.nn.relu(cat @ params["fc_w"] + params["fc_b"])
    h = jax.nn.relu(h @ params["pw"] + params["pb"])
    return jax.nn.sigmoid(h @ params["cw"] + params["cb"])


if __name__ == "__main__":
    # small shapes consistent with the module's forward
    B, T = 4, 16                  # batch, sequence length (conv "height")
    input_dim = 32                # keypoint feature dim (conv "width" == kernel width)
    n_filters = 8
    filter_sizes = (2, 3)
    cnn_output_dim = 32
    project_output_dim = 16
    num_classes = 4

    key = jax.random.PRNGKey(0)
    k_x, k_p = jax.random.split(key)
    feats = jax.random.normal(k_x, (B, T, input_dim), jnp.float32)
    params = init_params(k_p, input_dim, n_filters, filter_sizes,
                         cnn_output_dim, project_output_dim, num_classes)

    out, aux = one_actor_forward(feats, params, filter_sizes)
    out = jax.block_until_ready(out)
    aux = jax.block_until_ready(aux)

    ref = reference(feats, params, filter_sizes)
    assert out.shape == (B, num_classes)
    assert aux.shape == (1, 3)
    # exact sigmoid + f32 math: differences are only matmul rounding
    assert jnp.allclose(out, ref, rtol=1e-3, atol=1e-3), "mismatch vs. JAX reference"

    print("KERNEL_OK")
</pallas_src>

<mosaic_0001>
module attributes {stable_mosaic.version = 11 : i64} {
  func.func @kernel(%arg0: i32, %arg1: memref<8x16x32xf32, #tpu.memory_space<vmem>>, %arg2: memref<96x16xf32, #tpu.memory_space<vmem>>, %arg3: memref<16x16xf32, #tpu.memory_space<vmem>>, %arg4: memref<3x32x128xf32, #tpu.memory_space<vmem>>, %arg5: memref<4x128xf32, #tpu.memory_space<vmem>>, %arg6: memref<8x128xf32, #tpu.memory_space<vmem>>) attributes {dimension_semantics = [#tpu.dimension_semantics<parallel>], iteration_bounds = array<i64: 1>, scalar_prefetch = 0 : i64, scratch_operands = 0 : i64, tpu.core_type = #tpu.core_type<tc>, window_params = [{transform_indices = @transform_0, window_bounds = array<i64: 8, 16, 32>}, {pipeline_mode = #tpu.pipeline_mode<synchronous>, transform_indices = @transform_1, window_bounds = array<i64: 96, 16>}, {pipeline_mode = #tpu.pipeline_mode<synchronous>, transform_indices = @transform_2, window_bounds = array<i64: 16, 16>}, {pipeline_mode = #tpu.pipeline_mode<synchronous>, transform_indices = @transform_3, window_bounds = array<i64: 3, 32, 128>}, {pipeline_mode = #tpu.pipeline_mode<synchronous>, transform_indices = @transform_4, window_bounds = array<i64: 4, 128>}, {transform_indices = @transform_5, window_bounds = array<i64: 8, 128>}]} {
    %c0 = arith.constant 0 : index
    %c0_0 = arith.constant 0 : index
    %c0_1 = arith.constant 0 : index
    %0 = vector.load %arg1[%c0, %c0_0, %c0_1] : memref<8x16x32xf32, #tpu.memory_space<vmem>>, vector<8x16x32xf32>
    %1 = vector.extract_strided_slice %0 {offsets = [0, 1, 0], sizes = [8, 15, 32], strides = [1, 1, 1]} : vector<8x16x32xf32> to vector<8x15x32xf32>
    %cst = arith.constant 0.000000e+00 : f32
    %2 = vector.broadcast %cst : f32 to vector<8x1x32xf32>
    %3 = tpu.concatenate %1, %2 in 1 : vector<8x15x32xf32>, vector<8x1x32xf32> -> vector<8x16x32xf32>
    %4 = vector.extract_strided_slice %0 {offsets = [0, 2, 0], sizes = [8, 14, 32], strides = [1, 1, 1]} : vector<8x16x32xf32> to vector<8x14x32xf32>
    %cst_2 = arith.constant 0.000000e+00 : f32
    %5 = vector.broadcast %cst_2 : f32 to vector<8x2x32xf32>
    %6 = tpu.concatenate %4, %5 in 1 : vector<8x14x32xf32>, vector<8x2x32xf32> -> vector<8x16x32xf32>
    %7 = tpu.concatenate %0, %3, %6 in 2 : vector<8x16x32xf32>, vector<8x16x32xf32>, vector<8x16x32xf32> -> vector<8x16x96xf32>
    %8 = vector.shape_cast %7 : vector<8x16x96xf32> to vector<128x96xf32>
    %c0_3 = arith.constant 0 : index
    %c0_4 = arith.constant 0 : index
    %9 = vector.load %arg2[%c0_3, %c0_4] : memref<96x16xf32, #tpu.memory_space<vmem>>, vector<96x16xf32>
    %cst_5 = arith.constant dense<0.000000e+00> : vector<128x16xf32>
    %10 = tpu.matmul %8, %9, %cst_5 {dimension_numbers = #tpu.dot_dimension_numbers<[1], [0], [0], [1], [0, 0, 1, 1], [], []>} : vector<128x96xf32>, vector<96x16xf32>, vector<128x16xf32> -> vector<128x16xf32>
    %11 = vector.shape_cast %10 : vector<128x16xf32> to vector<8x16x16xf32>
    %c0_6 = arith.constant 0 : index
    %c0_7 = arith.constant 0 : index
    %12 = vector.load %arg3[%c0_6, %c0_7] : memref<16x16xf32, #tpu.memory_space<vmem>>, vector<16x16xf32>
    %13 = vector.shape_cast %12 : vector<16x16xf32> to vector<1x16x16xf32>
    %14 = vector.broadcast %13 : vector<1x16x16xf32> to vector<8x16x16xf32>
    %15 = arith.addf %11, %14 : vector<8x16x16xf32>
    %cst_8 = arith.constant dense<0xFF800000> : vector<8x16xf32>
    %16 = vector.multi_reduction <maximumf>, %15, %cst_8 [1] : vector<8x16x16xf32> to vector<8x16xf32>
    %c0_9 = arith.constant 0 : index
    %c0_10 = arith.constant 0 : index
    %17 = vector.load %arg5[%c0_9, %c0_10] : memref<4x128xf32, #tpu.memory_space<vmem>>, vector<4x128xf32>
    %18 = vector.extract_strided_slice %17 {offsets = [0, 0], sizes = [1, 16], strides = [1, 1]} : vector<4x128xf32> to vector<1x16xf32>
    %19 = vector.broadcast %18 : vector<1x16xf32> to vector<8x16xf32>
    %20 = arith.addf %16, %19 : vector<8x16xf32>
    %cst_11 = arith.constant 0.000000e+00 : f32
    %21 = vector.broadcast %cst_11 : f32 to vector<8x16xf32>
    %22 = arith.maximumf %20, %21 : vector<8x16xf32>
    %c0_12 = arith.constant 0 : index
    %c0_13 = arith.constant 0 : index
    %c0_14 = arith.constant 0 : index
    %23 = vector.load %arg4[%c0_12, %c0_13, %c0_14] : memref<3x32x128xf32, #tpu.memory_space<vmem>>, vector<3x32x128xf32>
    %24 = vector.extract_strided_slice %23 {offsets = [0, 0, 0], sizes = [1, 16, 32], strides = [1, 1, 1]} : vector<3x32x128xf32> to vector<1x16x32xf32>
    %25 = vector.shape_cast %24 : vector<1x16x32xf32> to vector<16x32xf32>
    %cst_15 = arith.constant dense<0.000000e+00> : vector<8x32xf32>
    %26 = tpu.matmul %22, %25, %cst_15 {dimension_numbers = #tpu.dot_dimension_numbers<[1], [0], [0], [1], [0, 0, 1, 1], [], []>} : vector<8x16xf32>, vector<16x32xf32>, vector<8x32xf32> -> vector<8x32xf32>
    %27 = vector.extract_strided_slice %17 {offsets = [1, 0], sizes = [1, 32], strides = [1, 1]} : vector<4x128xf32> to vector<1x32xf32>
    %28 = vector.broadcast %27 : vector<1x32xf32> to vector<8x32xf32>
    %29 = arith.addf %26, %28 : vector<8x32xf32>
    %cst_16 = arith.constant 0.000000e+00 : f32
    %30 = vector.broadcast %cst_16 : f32 to vector<8x32xf32>
    %31 = arith.maximumf %29, %30 : vector<8x32xf32>
    %32 = vector.extract_strided_slice %23 {offsets = [1, 0, 0], sizes = [1, 32, 16], strides = [1, 1, 1]} : vector<3x32x128xf32> to vector<1x32x16xf32>
    %33 = vector.shape_cast %32 : vector<1x32x16xf32> to vector<32x16xf32>
    %cst_17 = arith.constant dense<0.000000e+00> : vector<8x16xf32>
    %34 = tpu.matmul %31, %33, %cst_17 {dimension_numbers = #tpu.dot_dimension_numbers<[1], [0], [0], [1], [0, 0, 1, 1], [], []>} : vector<8x32xf32>, vector<32x16xf32>, vector<8x16xf32> -> vector<8x16xf32>
    %35 = vector.extract_strided_slice %17 {offsets = [2, 0], sizes = [1, 16], strides = [1, 1]} : vector<4x128xf32> to vector<1x16xf32>
    %36 = vector.broadcast %35 : vector<1x16xf32> to vector<8x16xf32>
    %37 = arith.addf %34, %36 : vector<8x16xf32>
    %cst_18 = arith.constant 0.000000e+00 : f32
    %38 = vector.broadcast %cst_18 : f32 to vector<8x16xf32>
    %39 = arith.maximumf %37, %38 : vector<8x16xf32>
    %40 = vector.extract_strided_slice %23 {offsets = [2, 0, 0], sizes = [1, 16, 128], strides = [1, 1, 1]} : vector<3x32x128xf32> to vector<1x16x128xf32>
    %41 = vector.shape_cast %40 : vector<1x16x128xf32> to vector<16x128xf32>
    %cst_19 = arith.constant dense<0.000000e+00> : vector<8x128xf32>
    %42 = tpu.matmul %39, %41, %cst_19 {dimension_numbers = #tpu.dot_dimension_numbers<[1], [0], [0], [1], [0, 0, 1, 1], [], []>} : vector<8x16xf32>, vector<16x128xf32>, vector<8x128xf32> -> vector<8x128xf32>
    %43 = vector.extract_strided_slice %17 {offsets = [3, 0], sizes = [1, 128], strides = [1, 1]} : vector<4x128xf32> to vector<1x128xf32>
    %44 = vector.broadcast %43 : vector<1x128xf32> to vector<8x128xf32>
    %45 = arith.addf %42, %44 : vector<8x128xf32>
    %cst_20 = arith.constant 0.000000e+00 : f32
    %46 = vector.broadcast %cst_20 : f32 to vector<8x128xf32>
    %47 = arith.subf %46, %45 : vector<8x128xf32>
    %48 = math.exp %47 : vector<8x128xf32>
    %cst_21 = arith.constant 1.000000e+00 : f32
    %49 = vector.broadcast %cst_21 : f32 to vector<8x128xf32>
    %50 = arith.addf %49, %48 : vector<8x128xf32>
    %cst_22 = arith.constant 1.000000e+00 : f32
    %51 = vector.broadcast %cst_22 : f32 to vector<8x128xf32>
    %52 = arith.divf %51, %50 : vector<8x128xf32>
    %c0_23 = arith.constant 0 : index
    %c0_24 = arith.constant 0 : index
    %53 = vector.load %arg6[%c0_23, %c0_24] : memref<8x128xf32, #tpu.memory_space<vmem>>, vector<8x128xf32>
    tpu.vector_store %arg6[%c0_23, %c0_24], %52 {strides = array<i32>} : memref<8x128xf32, #tpu.memory_space<vmem>>, vector<8x128xf32>,
    return
  }
  func.func @transform_0(%arg0: i32) -> (i32, i32, i32) {
    %c0_i32 = arith.constant 0 : i32
    %c0_i32_0 = arith.constant 0 : i32
    %c0_i32_1 = arith.constant 0 : i32
    return %arg0, %c0_i32, %c0_i32_0 : i32, i32, i32
  }
  func.func @transform_1(%arg0: i32) -> (i32, i32) {
    %c0_i32 = arith.constant 0 : i32
    %c0_i32_0 = arith.constant 0 : i32
    %c0_i32_1 = arith.constant 0 : i32
    return %c0_i32, %c0_i32_0 : i32, i32
  }
  func.func @transform_2(%arg0: i32) -> (i32, i32) {
    %c0_i32 = arith.constant 0 : i32
    %c0_i32_0 = arith.constant 0 : i32
    %c0_i32_1 = arith.constant 0 : i32
    return %c0_i32, %c0_i32_0 : i32, i32
  }
  func.func @transform_3(%arg0: i32) -> (i32, i32, i32) {
    %c0_i32 = arith.constant 0 : i32
    %c0_i32_0 = arith.constant 0 : i32
    %c0_i32_1 = arith.constant 0 : i32
    %c0_i32_2 = arith.constant 0 : i32
    return %c0_i32, %c0_i32_0, %c0_i32_1 : i32, i32, i32
  }
  func.func @transform_4(%arg0: i32) -> (i32, i32) {
    %c0_i32 = arith.constant 0 : i32
    %c0_i32_0 = arith.constant 0 : i32
    %c0_i32_1 = arith.constant 0 : i32
    return %c0_i32, %c0_i32_0 : i32, i32
  }
  func.func @transform_5(%arg0: i32) -> (i32, i32) {
    %c0_i32 = arith.constant 0 : i32
    %c0_i32_0 = arith.constant 0 : i32
    return %arg0, %c0_i32 : i32, i32
  }
}

</mosaic_0001>

<llo_original>
// kernel: tpu_custom_call.1
$region0: #{tpu_custom_call.1}
  #allocation0 [shape = 'u32[]', space=smem, size = 0x4, offset = 0x4, fixed_abs, tag = 'smem constant byte address 0x4 - core index']
  #allocation1 [shape = 'u32[144,128]{1,0:T(1,128)}', space=vmem, size = 0x12000, scoped, tag = 'internal scratch']
  %s0 = inlined_call_operand.hbm [shape: f32[8,16,32], index: 0, kind: input, shape index: {}]
  %s1 = inlined_call_operand.vmem [shape: f32[96,16], index: 1, kind: input, shape index: {}]
  %s2 = inlined_call_operand.vmem [shape: f32[16,16], index: 2, kind: input, shape index: {}]
  %s3 = inlined_call_operand.vmem [shape: f32[3,32,128], index: 3, kind: input, shape index: {}]
  %s4 = inlined_call_operand.vmem [shape: f32[4,128], index: 4, kind: input, shape index: {}]
  %s5 = inlined_call_operand.hbm [shape: f32[8,128], index: 5, kind: output, shape index: {}]
  %s6 = sld [smem:[#allocation0]]
  $region34: #{tpu_custom_call.1} parent=0
    _
  %s8 = ssub.s32 1, %s6
  %s9 = scalar_select 0, %s8, %s6
  $region1: #{tpu_custom_call.1} parent=0
    #allocation2 [shape = 'u8[65536]{0}', space=vmem, size = 0x10000, scoped, tag = 'input window, operand 0, single buffered']
    #allocation3 [shape = 's32[1]{0}', space=sflag, size = 0x4, scoped, tag = 'scoped memory for tpu_custom_call.1']
    #allocation4 [shape = 's32[1]{0}', space=sflag, size = 0x4, scoped, tag = 'scoped memory for tpu_custom_call.1']
    #allocation5 [shape = 'u8[4096]{0}', space=vmem, size = 0x1000, scoped, tag = 'output window, operand 0, single buffered']
    %10 = vsyncpa [#allocation3], 0
    %11 = vsyncpa [#allocation4], 0
    // Predicated region
    $region2: #{tpu_custom_call.1} parent=1 // pred_check
      _
    $region3: #{tpu_custom_call.1} parent=1 // pred_check_branch
      %13 = sbr.rel (0) target = $region5
    $region4: #{tpu_custom_call.1} parent=1 // pred_region
      %s15 = ssub.s32 2048, 2048
      %16 = vsyncadd [#allocation3], %s15
      %s17 = sshll.u32 [#allocation2], 4
      %s18 = int_to_ptr.vmem [resolvable:$true] %s17
      %23 = dma.hbm_to_vmem [thread:$0]  %s0, 2048, %s18, [#allocation3], 128, 128, 8
    $region5: #{tpu_custom_call.1} parent=1 // pred_fallthru
      _
    // Predicated region
    $region6: #{tpu_custom_call.1} parent=1 // pred_check
      _
    $region7: #{tpu_custom_call.1} parent=1 // pred_check_branch
      %25 = sbr.rel (0) target = $region9
    $region8: #{tpu_custom_call.1} parent=1 // pred_region
      _
    $region9: #{tpu_custom_call.1} parent=1 // pred_fallthru
      _
    // Predicated region
    $region10: #{tpu_custom_call.1} parent=1 // pred_check
      _
    $region11: #{tpu_custom_call.1} parent=1 // pred_check_branch
      %27 = sbr.rel (0) target = $region13
    $region12: #{tpu_custom_call.1} parent=1 // pred_region
      _
    $region13: #{tpu_custom_call.1} parent=1 // pred_fallthru
      _
    // Predicated region
    $region14: #{tpu_custom_call.1} parent=1 // pred_check
      _
    $region15: #{tpu_custom_call.1} parent=1 // pred_check_branch
      %29 = sbr.rel (0) target = $region17
    $region16: #{tpu_custom_call.1} parent=1 // pred_region
      _
    $region17: #{tpu_custom_call.1} parent=1 // pred_fallthru
      _
    // Predicated region
    $region18: #{tpu_custom_call.1} parent=1 // pred_check
      _
    $region19: #{tpu_custom_call.1} parent=1 // pred_check_branch
      %31 = sbr.rel (0) target = $region21
    $region20: #{tpu_custom_call.1} parent=1 // pred_region
      _
    $region21: #{tpu_custom_call.1} parent=1 // pred_fallthru
      _
    // Predicated region
    $region22: #{tpu_custom_call.1} parent=1 // pred_check
      _
    $region23: #{tpu_custom_call.1} parent=1 // pred_check_branch
      %33 = sbr.rel (0) target = $region25
    $region24: #{tpu_custom_call.1} parent=1 // pred_region
      %34 = dma.done [#allocation3], 2048
    $region25: #{tpu_custom_call.1} parent=1 // pred_fallthru
      _
    %v35 = vld [vmem:[#allocation2] sm:$0xff]
    %v36 = vld [vmem:[#allocation2 + $0x8] sm:$0xff]
    %v37 = vld [vmem:[#allocation2 + $0x10] sm:$0xff]
    %v38 = vld [vmem:[#allocation2 + $0x18] sm:$0xff]
    %v39 = vld [vmem:[#allocation2 + $0x20] sm:$0xff]
    %v40 = vld [vmem:[#allocation2 + $0x28] sm:$0xff]
    %v41 = vld [vmem:[#allocation2 + $0x30] sm:$0xff]
    %v42 = vld [vmem:[#allocation2 + $0x38] sm:$0xff]
    %v43 = vld [vmem:[#allocation2 + $0x40] sm:$0xff]
    %v44 = vld [vmem:[#allocation2 + $0x48] sm:$0xff]
    %v45 = vld [vmem:[#allocation2 + $0x50] sm:$0xff]
    %v46 = vld [vmem:[#allocation2 + $0x58] sm:$0xff]
    %v47 = vld [vmem:[#allocation2 + $0x60] sm:$0xff]
    %v48 = vld [vmem:[#allocation2 + $0x68] sm:$0xff]
    %v49 = vld [vmem:[#allocation2 + $0x70] sm:$0xff]
    %v50 = vld [vmem:[#allocation2 + $0x78] sm:$0xff]
    %vm67 = vcmask 1046528
    %v68 = vrot.slane %v35, 1
    %v69 = vrot.slane %v36, 1
    %v70 = vsel %vm67, %v68, %v69
    %v71 = vrot.slane %v37, 1
    %v72 = vrot.slane %v38, 1
    %v73 = vsel %vm67, %v71, %v72
    %v74 = vrot.slane %v39, 1
    %v75 = vrot.slane %v40, 1
    %v76 = vsel %vm67, %v74, %v75
    %v77 = vrot.slane %v41, 1
    %v78 = vrot.slane %v42, 1
    %v79 = vsel %vm67, %v77, %v78
    %v80 = vrot.slane %v43, 1
    %v81 = vrot.slane %v44, 1
    %v82 = vsel %vm67, %v80, %v81
    %v83 = vrot.slane %v45, 1
    %v84 = vrot.slane %v46, 1
    %v85 = vsel %vm67, %v83, %v84
    %v86 = vrot.slane %v47, 1
    %v87 = vrot.slane %v48, 1
    %v88 = vsel %vm67, %v86, %v87
    %v89 = vrot.slane %v49, 1
    %v90 = vrot.slane %v50, 1
    %v91 = vsel %vm67, %v89, %v90
    %v100 = vsel %vm67, %v69, 0.0
    %v101 = vsel %vm67, %v72, 0.0
    %v102 = vsel %vm67, %v75, 0.0
    %v103 = vsel %vm67, %v78, 0.0
    %v104 = vsel %vm67, %v81, 0.0
    %v105 = vsel %vm67, %v84, 0.0
    %v106 = vsel %vm67, %v87, 0.0
    %v107 = vsel %vm67, %v90, 0.0
    %vm108 = vcmask 1045504
    %v109 = vrot.slane %v35, 2
    %v110 = vrot.slane %v36, 2
    %v111 = vsel %vm108, %v109, %v110
    %v112 = vrot.slane %v37, 2
    %v113 = vrot.slane %v38, 2
    %v114 = vsel %vm108, %v112, %v113
    %v115 = vrot.slane %v39, 2
    %v116 = vrot.slane %v40, 2
    %v117 = vsel %vm108, %v115, %v116
    %v118 = vrot.slane %v41, 2
    %v119 = vrot.slane %v42, 2
    %v120 = vsel %vm108, %v118, %v119
    %v121 = vrot.slane %v43, 2
    %v122 = vrot.slane %v44, 2
    %v123 = vsel %vm108, %v121, %v122
    %v124 = vrot.slane %v45, 2
    %v125 = vrot.slane %v46, 2
    %v126 = vsel %vm108, %v124, %v125
    %v127 = vrot.slane %v47, 2
    %v128 = vrot.slane %v48, 2
    %v129 = vsel %vm108, %v127, %v128
    %v130 = vrot.slane %v49, 2
    %v131 = vrot.slane %v50, 2
    %v132 = vsel %vm108, %v130, %v131
    %v141 = vsel %vm108, %v110, 0.0
    %v142 = vsel %vm108, %v113, 0.0
    %v143 = vsel %vm108, %v116, 0.0
    %v144 = vsel %vm108, %v119, 0.0
    %v145 = vsel %vm108, %v122, 0.0
    %v146 = vsel %vm108, %v125, 0.0
    %v147 = vsel %vm108, %v128, 0.0
    %v148 = vsel %vm108, %v131, 0.0
    %157 = vrot.lane.b32.xlu0 %v70, 32
    %v158 = vpop.permute.xlu0 %157
    %159 = vrot.lane.b32.xlu0 %v100, 32
    %v160 = vpop.permute.xlu0 %159
    %161 = vrot.lane.b32.xlu0 %v73, 32
    %v162 = vpop.permute.xlu0 %161
    %163 = vrot.lane.b32.xlu0 %v101, 32
    %v164 = vpop.permute.xlu0 %163
    %165 = vrot.lane.b32.xlu0 %v76, 32
    %v166 = vpop.permute.xlu0 %165
    %167 = vrot.lane.b32.xlu0 %v102, 32
    %v168 = vpop.permute.xlu0 %167
    %169 = vrot.lane.b32.xlu0 %v79, 32
    %v170 = vpop.permute.xlu0 %169
    %171 = vrot.lane.b32.xlu0 %v103, 32
    %v172 = vpop.permute.xlu0 %171
    %173 = vrot.lane.b32.xlu0 %v82, 32
    %v174 = vpop.permute.xlu0 %173
    %175 = vrot.lane.b32.xlu0 %v104, 32
    %v176 = vpop.permute.xlu0 %175
    %177 = vrot.lane.b32.xlu0 %v85, 32
    %v178 = vpop.permute.xlu0 %177
    %179 = vrot.lane.b32.xlu0 %v105, 32
    %v180 = vpop.permute.xlu0 %179
    %181 = vrot.lane.b32.xlu0 %v88, 32
    %v182 = vpop.permute.xlu0 %181
    %183 = vrot.lane.b32.xlu0 %v106, 32
    %v184 = vpop.permute.xlu0 %183
    %185 = vrot.lane.b32.xlu0 %v91, 32
    %v186 = vpop.permute.xlu0 %185
    %187 = vrot.lane.b32.xlu0 %v107, 32
    %v188 = vpop.permute.xlu0 %187
    %213 = vrot.lane.b32.xlu0 %v111, 64
    %v214 = vpop.permute.xlu0 %213
    %215 = vrot.lane.b32.xlu0 %v141, 64
    %v216 = vpop.permute.xlu0 %215
    %217 = vrot.lane.b32.xlu0 %v114, 64
    %v218 = vpop.permute.xlu0 %217
    %219 = vrot.lane.b32.xlu0 %v142, 64
    %v220 = vpop.permute.xlu0 %219
    %221 = vrot.lane.b32.xlu0 %v117, 64
    %v222 = vpop.permute.xlu0 %221
    %223 = vrot.lane.b32.xlu0 %v143, 64
    %v224 = vpop.permute.xlu0 %223
    %225 = vrot.lane.b32.xlu0 %v120, 64
    %v226 = vpop.permute.xlu0 %225
    %227 = vrot.lane.b32.xlu0 %v144, 64
    %v228 = vpop.permute.xlu0 %227
    %229 = vrot.lane.b32.xlu0 %v123, 64
    %v230 = vpop.permute.xlu0 %229
    %231 = vrot.lane.b32.xlu0 %v145, 64
    %v232 = vpop.permute.xlu0 %231
    %233 = vrot.lane.b32.xlu0 %v126, 64
    %v234 = vpop.permute.xlu0 %233
    %235 = vrot.lane.b32.xlu0 %v146, 64
    %v236 = vpop.permute.xlu0 %235
    %237 = vrot.lane.b32.xlu0 %v129, 64
    %v238 = vpop.permute.xlu0 %237
    %239 = vrot.lane.b32.xlu0 %v147, 64
    %v240 = vpop.permute.xlu0 %239
    %241 = vrot.lane.b32.xlu0 %v132, 64
    %v242 = vpop.permute.xlu0 %241
    %243 = vrot.lane.b32.xlu0 %v148, 64
    %v244 = vpop.permute.xlu0 %243
    %vm261 = vcmask 261120
    %v262 = vsel %vm261, %v35, %v158
    %v263 = vsel %vm261, %v36, %v160
    %v264 = vsel %vm261, %v37, %v162
    %v265 = vsel %vm261, %v38, %v164
    %v266 = vsel %vm261, %v39, %v166
    %v267 = vsel %vm261, %v40, %v168
    %v268 = vsel %vm261, %v41, %v170
    %v269 = vsel %vm261, %v42, %v172
    %v270 = vsel %vm261, %v43, %v174
    %v271 = vsel %vm261, %v44, %v176
    %v272 = vsel %vm261, %v45, %v178
    %v273 = vsel %vm261, %v46, %v180
    %v274 = vsel %vm261, %v47, %v182
    %v275 = vsel %vm261, %v48, %v184
    %v276 = vsel %vm261, %v49, %v186
    %v277 = vsel %vm261, %v50, %v188
    %vm278 = vcmask 523264
    %v279 = vsel %vm278, %v262, %v214
    %v280 = vsel %vm278, %v263, %v216
    %v281 = vsel %vm278, %v264, %v218
    %v282 = vsel %vm278, %v265, %v220
    %v283 = vsel %vm278, %v266, %v222
    %v284 = vsel %vm278, %v267, %v224
    %v285 = vsel %vm278, %v268, %v226
    %v286 = vsel %vm278, %v269, %v228
    %v287 = vsel %vm278, %v270, %v230
    %v288 = vsel %vm278, %v271, %v232
    %v289 = vsel %vm278, %v272, %v234
    %v290 = vsel %vm278, %v273, %v236
    %v291 = vsel %vm278, %v274, %v238
    %v292 = vsel %vm278, %v275, %v240
    %v293 = vsel %vm278, %v276, %v242
    %v294 = vsel %vm278, %v277, %v244
    %v295 = vld [vmem:[%s1] sm:$0xff]
    %v296 = vld [vmem:[%s1 + $0x8] sm:$0xff]
    %v297 = vld [vmem:[%s1 + $0x10] sm:$0xff]
    %v298 = vld [vmem:[%s1 + $0x18] sm:$0xff]
    %v299 = vld [vmem:[%s1 + $0x20] sm:$0xff]
    %v300 = vld [vmem:[%s1 + $0x28] sm:$0xff]
    %v301 = vld [vmem:[%s1 + $0x30] sm:$0xff]
    %v302 = vld [vmem:[%s1 + $0x38] sm:$0xff]
    %v303 = vld [vmem:[%s1 + $0x40] sm:$0xff]
    %v304 = vld [vmem:[%s1 + $0x48] sm:$0xff]
    %v305 = vld [vmem:[%s1 + $0x50] sm:$0xff]
    %v306 = vld [vmem:[%s1 + $0x58] sm:$0xff]
    %vm307 = vcmask 785408
    %v309 = vsel %vm307, %v279, 0
    %v312 = vsel %vm307, %v280, 0
    %v315 = vsel %vm307, %v281, 0
    %v318 = vsel %vm307, %v282, 0
    %v321 = vsel %vm307, %v283, 0
    %v324 = vsel %vm307, %v284, 0
    %v327 = vsel %vm307, %v285, 0
    %v330 = vsel %vm307, %v286, 0
    %v333 = vsel %vm307, %v287, 0
    %v336 = vsel %vm307, %v288, 0
    %v339 = vsel %vm307, %v289, 0
    %v342 = vsel %vm307, %v290, 0
    %v345 = vsel %vm307, %v291, 0
    %v348 = vsel %vm307, %v292, 0
    %v351 = vsel %vm307, %v293, 0
    %v354 = vsel %vm307, %v294, 0
    %356 = vmatprep.subr.mxu0 0.0
    %357 = vmatpush1.msra.mxu0 0.0
    %358 = vmatprep.subr.mxu0 0.0
    %359 = vmatpush1.msra.mxu0 0.0
    %360 = vmatprep.subr.mxu0 0.0
    %361 = vmatpush1.msra.mxu0 0.0
    %362 = vmatprep.subr.mxu0 0.0
    %363 = vmatpush1.msra.mxu0 0.0
    %364 = vmatprep.subr.mxu0 0.0
    %365 = vmatpush1.msra.mxu0 %v306
    %366 = vmatprep.subr.mxu0 0.0
    %367 = vmatpush1.msra.mxu0 %v305
    %368 = vmatprep.subr.mxu0 0.0
    %369 = vmatpush1.msra.mxu0 %v304
    %370 = vmatprep.subr.mxu0 0.0
    %371 = vmatpush1.msra.mxu0 %v303
    %372 = vmatprep.subr.mxu0 0.0
    %373 = vmatpush1.msra.mxu0 %v302
    %374 = vmatprep.subr.mxu0 0.0
    %375 = vmatpush1.msra.mxu0 %v301
    %376 = vmatprep.subr.mxu0 0.0
    %377 = vmatpush1.msra.mxu0 %v300
    %378 = vmatprep.subr.mxu0 0.0
    %379 = vmatpush1.msra.mxu0 %v299
    %380 = vmatprep.subr.mxu0 0.0
    %381 = vmatpush1.msra.mxu0 %v298
    %382 = vmatprep.subr.mxu0 0.0
    %383 = vmatpush1.msra.mxu0 %v297
    %384 = vmatprep.subr.mxu0 0.0
    %385 = vmatpush1.msra.mxu0 %v296
    %386 = vmatprep.subr.mxu0 0.0
    %387 = vmatpush1.msra.mxu0 %v295
    %388 = vmatprep.subr.mxu0 0.0
    %389 = vmatpush2.msra.mxu0 0.0
    %390 = vmatprep.subr.mxu0 0.0
    %391 = vmatpush2.msra.mxu0 0.0
    %392 = vmatprep.subr.mxu0 0.0
    %393 = vmatpush2.msra.mxu0 0.0
    %394 = vmatprep.subr.mxu0 0.0
    %395 = vmatpush2.msra.mxu0 0.0
    %396 = vmatprep.subr.mxu0 0.0
    %397 = vmatpush2.msra.mxu0 0.0
    %398 = vmatprep.subr.mxu0 0.0
    %399 = vmatpush2.msra.mxu0 0.0
    %400 = vmatprep.subr.mxu0 0.0
    %401 = vmatpush2.msra.mxu0 0.0
    %402 = vmatprep.subr.mxu0 0.0
    %403 = vmatpush2.msra.mxu0 0.0
    %404 = vmatprep.subr.mxu0 0.0
    %405 = vmatpush2.msra.mxu0 0.0
    %406 = vmatprep.subr.mxu0 0.0
    %407 = vmatpush2.msra.mxu0 0.0
    %408 = vmatprep.subr.mxu0 0.0
    %409 = vmatpush2.msra.mxu0 0.0
    %410 = vmatprep.subr.mxu0 0.0
    %411 = vmatpush2.msra.mxu0 0.0
    %412 = vmatprep.subr.mxu0 0.0
    %413 = vmatpush2.msra.mxu0 0.0
    %414 = vmatprep.subr.mxu0 0.0
    %415 = vmatpush2.msra.mxu0 0.0
    %416 = vmatprep.subr.mxu0 0.0
    %417 = vmatpush2.msra.mxu0 0.0
    %418 = vmatprep.subr.mxu0 0.0
    %419 = vmatpush2.msra.mxu0 0.0
    %420 = vmatprep.mubr.f32.mxu0 0.0
    %421 = vmatmul.mubr.f32.gmra.mxu0 %v309
    %v422 = vpop.f32.mrf.mxu0
    %v423 = vadd.f32 0.0, %v422
    %v424 = vpop.f32.mrf.mxu0
    %425 = vmatprep.mubr.f32.mxu0 0.0
    %426 = vmatmul.mubr.f32.gmra.mxu0 %v312
    %v427 = vpop.f32.mrf.mxu0
    %v428 = vadd.f32 0.0, %v427
    %v429 = vpop.f32.mrf.mxu0
    %430 = vmatprep.mubr.f32.mxu0 0.0
    %431 = vmatmul.mubr.f32.gmra.mxu0 %v315
    %v432 = vpop.f32.mrf.mxu0
    %v433 = vadd.f32 0.0, %v432
    %v434 = vpop.f32.mrf.mxu0
    %435 = vmatprep.mubr.f32.mxu0 0.0
    %436 = vmatmul.mubr.f32.gmra.mxu0 %v318
    %v437 = vpop.f32.mrf.mxu0
    %v438 = vadd.f32 0.0, %v437
    %v439 = vpop.f32.mrf.mxu0
    %440 = vmatprep.mubr.f32.mxu0 0.0
    %441 = vmatmul.mubr.f32.gmra.mxu0 %v321
    %v442 = vpop.f32.mrf.mxu0
    %v443 = vadd.f32 0.0, %v442
    %v444 = vpop.f32.mrf.mxu0
    %445 = vmatprep.mubr.f32.mxu0 0.0
    %446 = vmatmul.mubr.f32.gmra.mxu0 %v324
    %v447 = vpop.f32.mrf.mxu0
    %v448 = vadd.f32 0.0, %v447
    %v449 = vpop.f32.mrf.mxu0
    %450 = vmatprep.mubr.f32.mxu0 0.0
    %451 = vmatmul.mubr.f32.gmra.mxu0 %v327
    %v452 = vpop.f32.mrf.mxu0
    %v453 = vadd.f32 0.0, %v452
    %v454 = vpop.f32.mrf.mxu0
    %455 = vmatprep.mubr.f32.mxu0 0.0
    %456 = vmatmul.mubr.f32.gmra.mxu0 %v330
    %v457 = vpop.f32.mrf.mxu0
    %v458 = vadd.f32 0.0, %v457
    %v459 = vpop.f32.mrf.mxu0
    %460 = vmatprep.mubr.f32.mxu0 0.0
    %461 = vmatmul.mubr.f32.gmra.mxu0 %v333
    %v462 = vpop.f32.mrf.mxu0
    %v463 = vadd.f32 0.0, %v462
    %v464 = vpop.f32.mrf.mxu0
    %465 = vmatprep.mubr.f32.mxu0 0.0
    %466 = vmatmul.mubr.f32.gmra.mxu0 %v336
    %v467 = vpop.f32.mrf.mxu0
    %v468 = vadd.f32 0.0, %v467
    %v469 = vpop.f32.mrf.mxu0
    %470 = vmatprep.mubr.f32.mxu0 0.0
    %471 = vmatmul.mubr.f32.gmra.mxu0 %v339
    %v472 = vpop.f32.mrf.mxu0
    %v473 = vadd.f32 0.0, %v472
    %v474 = vpop.f32.mrf.mxu0
    %475 = vmatprep.mubr.f32.mxu0 0.0
    %476 = vmatmul.mubr.f32.gmra.mxu0 %v342
    %v477 = vpop.f32.mrf.mxu0
    %v478 = vadd.f32 0.0, %v477
    %v479 = vpop.f32.mrf.mxu0
    %480 = vmatprep.mubr.f32.mxu0 0.0
    %481 = vmatmul.mubr.f32.gmra.mxu0 %v345
    %v482 = vpop.f32.mrf.mxu0
    %v483 = vadd.f32 0.0, %v482
    %v484 = vpop.f32.mrf.mxu0
    %485 = vmatprep.mubr.f32.mxu0 0.0
    %486 = vmatmul.mubr.f32.gmra.mxu0 %v348
    %v487 = vpop.f32.mrf.mxu0
    %v488 = vadd.f32 0.0, %v487
    %v489 = vpop.f32.mrf.mxu0
    %490 = vmatprep.mubr.f32.mxu0 0.0
    %491 = vmatmul.mubr.f32.gmra.mxu0 %v351
    %v492 = vpop.f32.mrf.mxu0
    %v493 = vadd.f32 0.0, %v492
    %v494 = vpop.f32.mrf.mxu0
    %495 = vmatprep.mubr.f32.mxu0 0.0
    %496 = vmatmul.mubr.f32.gmra.mxu0 %v354
    %v497 = vpop.f32.mrf.mxu0
    %v498 = vadd.f32 0.0, %v497
    %v499 = vpop.f32.mrf.mxu0
    %500 = vdwg.mxu0
    %v501 = vld [vmem:[%s2] sm:$0xff]
    %v502 = vld [vmem:[%s2 + $0x8] sm:$0xff]
    %v503 = vadd.f32 %v423, %v501
    %v504 = vadd.f32 %v428, %v502
    %v505 = vadd.f32 %v433, %v501
    %v506 = vadd.f32 %v438, %v502
    %v507 = vadd.f32 %v443, %v501
    %v508 = vadd.f32 %v448, %v502
    %v509 = vadd.f32 %v453, %v501
    %v510 = vadd.f32 %v458, %v502
    %v511 = vadd.f32 %v463, %v501
    %v512 = vadd.f32 %v468, %v502
    %v513 = vadd.f32 %v473, %v501
    %v514 = vadd.f32 %v478, %v502
    %v515 = vadd.f32 %v483, %v501
    %v516 = vadd.f32 %v488, %v502
    %v517 = vadd.f32 %v493, %v501
    %v518 = vadd.f32 %v498, %v502
    %vm519 = vcmask 130048
    %v520 = vsel %vm519, %v503, -inf
    %v521 = vsel %vm519, %v504, -inf
    %v522 = vmax.f32 %v520, %v521
    %v523 = vrot.slane %v522, 4
    %v524 = vmax.f32 %v522, %v523
    %v525 = vrot.slane %v524, 2
    %v526 = vmax.f32 %v524, %v525
    %v527 = vrot.slane %v526, 1
    %v528 = vmax.f32 %v526, %v527
    %v529 = vsel %vm519, %v505, -inf
    %v530 = vsel %vm519, %v506, -inf
    %v531 = vmax.f32 %v529, %v530
    %v532 = vrot.slane %v531, 4
    %v533 = vmax.f32 %v531, %v532
    %v534 = vrot.slane %v533, 2
    %v535 = vmax.f32 %v533, %v534
    %v536 = vrot.slane %v535, 1
    %v537 = vmax.f32 %v535, %v536
    %v538 = vsel %vm519, %v507, -inf
    %v539 = vsel %vm519, %v508, -inf
    %v540 = vmax.f32 %v538, %v539
    %v541 = vrot.slane %v540, 4
    %v542 = vmax.f32 %v540, %v541
    %v543 = vrot.slane %v542, 2
    %v544 = vmax.f32 %v542, %v543
    %v545 = vrot.slane %v544, 1
    %v546 = vmax.f32 %v544, %v545
    %v547 = vsel %vm519, %v509, -inf
    %v548 = vsel %vm519, %v510, -inf
    %v549 = vmax.f32 %v547, %v548
    %v550 = vrot.slane %v549, 4
    %v551 = vmax.f32 %v549, %v550
    %v552 = vrot.slane %v551, 2
    %v553 = vmax.f32 %v551, %v552
    %v554 = vrot.slane %v553, 1
    %v555 = vmax.f32 %v553, %v554
    %v556 = vsel %vm519, %v511, -inf
    %v557 = vsel %vm519, %v512, -inf
    %v558 = vmax.f32 %v556, %v557
    %v559 = vrot.slane %v558, 4
    %v560 = vmax.f32 %v558, %v559
    %v561 = vrot.slane %v560, 2
    %v562 = vmax.f32 %v560, %v561
    %v563 = vrot.slane %v562, 1
    %v564 = vmax.f32 %v562, %v563
    %v565 = vsel %vm519, %v513, -inf
    %v566 = vsel %vm519, %v514, -inf
    %v567 = vmax.f32 %v565, %v566
    %v568 = vrot.slane %v567, 4
    %v569 = vmax.f32 %v567, %v568
    %v570 = vrot.slane %v569, 2
    %v571 = vmax.f32 %v569, %v570
    %v572 = vrot.slane %v571, 1
    %v573 = vmax.f32 %v571, %v572
    %v574 = vsel %vm519, %v515, -inf
    %v575 = vsel %vm519, %v516, -inf
    %v576 = vmax.f32 %v574, %v575
    %v577 = vrot.slane %v576, 4
    %v578 = vmax.f32 %v576, %v577
    %v579 = vrot.slane %v578, 2
    %v580 = vmax.f32 %v578, %v579
    %v581 = vrot.slane %v580, 1
    %v582 = vmax.f32 %v580, %v581
    %v583 = vsel %vm519, %v517, -inf
    %v584 = vsel %vm519, %v518, -inf
    %v585 = vmax.f32 %v583, %v584
    %v586 = vrot.slane %v585, 4
    %v587 = vmax.f32 %v585, %v586
    %v588 = vrot.slane %v587, 2
    %v589 = vmax.f32 %v587, %v588
    %v590 = vrot.slane %v589, 1
    %v591 = vmax.f32 %v589, %v590
    %v592 = vld [vmem:[%s4] sm:$0xf]
    %v593 = vlaneseq
    %v594 = vshrl.u32 %v593, 7
    %v595 = vsub.s32 0, %v594
    %v596 = vrot.slane %v592, %v595
    %v597 = vadd.f32 %v528, %v596
    %v598 = vadd.f32 %v537, %v596
    %v599 = vadd.f32 %v546, %v596
    %v600 = vadd.f32 %v555, %v596
    %v601 = vadd.f32 %v564, %v596
    %v602 = vadd.f32 %v573, %v596
    %v603 = vadd.f32 %v582, %v596
    %v604 = vadd.f32 %v591, %v596
    %v605 = vmax.f32 %v597, 0.0
    %v606 = vmax.f32 %v598, 0.0
    %v607 = vmax.f32 %v599, 0.0
    %v608 = vmax.f32 %v600, 0.0
    %v609 = vmax.f32 %v601, 0.0
    %v610 = vmax.f32 %v602, 0.0
    %v611 = vmax.f32 %v603, 0.0
    %v612 = vmax.f32 %v604, 0.0
    %v613 = vld [vmem:[%s3] sm:$0xff]
    %v614 = vld [vmem:[%s3 + $0x8] sm:$0xff]
    %v615 = vld [vmem:[%s3 + $0x20] sm:$0xff]
    %v616 = vld [vmem:[%s3 + $0x28] sm:$0xff]
    %v617 = vld [vmem:[%s3 + $0x30] sm:$0xff]
    %v618 = vld [vmem:[%s3 + $0x38] sm:$0xff]
    %v619 = vld [vmem:[%s3 + $0x40] sm:$0xff]
    %v620 = vld [vmem:[%s3 + $0x48] sm:$0xff]
    %v621 = vlaneseq
    %v622 = vshrl.u32 %v621, 7
    %v623 = vsub.s32 1, %v622
    %v624 = vrot.slane %v592, %v623
    %v633 = vrot.slane %v606, 7
    %vm634 = vcmask 1041409
    %v635 = vsel %vm634, %v633, %v605
    %v636 = vrot.slane %v607, 6
    %vm637 = vcmask 1042434
    %v638 = vsel %vm637, %v636, %v635
    %v639 = vrot.slane %v608, 5
    %vm640 = vcmask 1043459
    %v641 = vsel %vm640, %v639, %v638
    %v642 = vrot.slane %v609, 4
    %vm643 = vcmask 1044484
    %v644 = vsel %vm643, %v642, %v641
    %v645 = vrot.slane %v610, 3
    %vm646 = vcmask 1045509
    %v647 = vsel %vm646, %v645, %v644
    %v648 = vrot.slane %v611, 2
    %vm649 = vcmask 1046534
    %v650 = vsel %vm649, %v648, %v647
    %v651 = vrot.slane %v612, 1
    %vm652 = vcmask 1047559
    %v653 = vsel %vm652, %v651, %v650
    %v654 = vsel %vm519, %v653, 0
    %656 = vmatprep.subr.mxu0 0.0
    %657 = vmatpush1.msra.mxu0 0.0
    %658 = vmatprep.subr.mxu0 0.0
    %659 = vmatpush1.msra.mxu0 0.0
    %660 = vmatprep.subr.mxu0 0.0
    %661 = vmatpush1.msra.mxu0 0.0
    %662 = vmatprep.subr.mxu0 0.0
    %663 = vmatpush1.msra.mxu0 0.0
    %664 = vmatprep.subr.mxu0 0.0
    %665 = vmatpush1.msra.mxu0 0.0
    %666 = vmatprep.subr.mxu0 0.0
    %667 = vmatpush1.msra.mxu0 0.0
    %668 = vmatprep.subr.mxu0 0.0
    %669 = vmatpush1.msra.mxu0 0.0
    %670 = vmatprep.subr.mxu0 0.0
    %671 = vmatpush1.msra.mxu0 0.0
    %672 = vmatprep.subr.mxu0 0.0
    %673 = vmatpush1.msra.mxu0 0.0
    %674 = vmatprep.subr.mxu0 0.0
    %675 = vmatpush1.msra.mxu0 0.0
    %676 = vmatprep.subr.mxu0 0.0
    %677 = vmatpush1.msra.mxu0 0.0
    %678 = vmatprep.subr.mxu0 0.0
    %679 = vmatpush1.msra.mxu0 0.0
    %680 = vmatprep.subr.mxu0 0.0
    %681 = vmatpush1.msra.mxu0 0.0
    %682 = vmatprep.subr.mxu0 0.0
    %683 = vmatpush1.msra.mxu0 0.0
    %684 = vmatprep.subr.mxu0 0.0
    %685 = vmatpush1.msra.mxu0 %v614
    %686 = vmatprep.subr.mxu0 0.0
    %687 = vmatpush1.msra.mxu0 %v613
    %688 = vmatprep.subr.mxu0 0.0
    %689 = vmatpush2.msra.mxu0 0.0
    %690 = vmatprep.subr.mxu0 0.0
    %691 = vmatpush2.msra.mxu0 0.0
    %692 = vmatprep.subr.mxu0 0.0
    %693 = vmatpush2.msra.mxu0 0.0
    %694 = vmatprep.subr.mxu0 0.0
    %695 = vmatpush2.msra.mxu0 0.0
    %696 = vmatprep.subr.mxu0 0.0
    %697 = vmatpush2.msra.mxu0 0.0
    %698 = vmatprep.subr.mxu0 0.0
    %699 = vmatpush2.msra.mxu0 0.0
    %700 = vmatprep.subr.mxu0 0.0
    %701 = vmatpush2.msra.mxu0 0.0
    %702 = vmatprep.subr.mxu0 0.0
    %703 = vmatpush2.msra.mxu0 0.0
    %704 = vmatprep.subr.mxu0 0.0
    %705 = vmatpush2.msra.mxu0 0.0
    %706 = vmatprep.subr.mxu0 0.0
    %707 = vmatpush2.msra.mxu0 0.0
    %708 = vmatprep.subr.mxu0 0.0
    %709 = vmatpush2.msra.mxu0 0.0
    %710 = vmatprep.subr.mxu0 0.0
    %711 = vmatpush2.msra.mxu0 0.0
    %712 = vmatprep.subr.mxu0 0.0
    %713 = vmatpush2.msra.mxu0 0.0
    %714 = vmatprep.subr.mxu0 0.0
    %715 = vmatpush2.msra.mxu0 0.0
    %716 = vmatprep.subr.mxu0 0.0
    %717 = vmatpush2.msra.mxu0 0.0
    %718 = vmatprep.subr.mxu0 0.0
    %719 = vmatpush2.msra.mxu0 0.0
    %720 = vmatprep.mubr.f32.mxu0 0.0
    %721 = vmatmul.mubr.f32.gmra.mxu0 %v654
    %v722 = vpop.f32.mrf.mxu0
    %v723 = vadd.f32 %v624, %v722
    %v724 = vpop.f32.mrf.mxu0
    %725 = vdwg.mxu0
    %v726 = vmax.f32 %v723, 0.0
    %v727 = vlaneseq
    %v728 = vshrl.u32 %v727, 7
    %v729 = vsub.s32 2, %v728
    %v730 = vrot.slane %v592, %v729
    %v732 = vsel %vm261, %v726, 0
    %734 = vmatprep.subr.mxu0 0.0
    %735 = vmatpush1.msra.mxu0 0.0
    %736 = vmatprep.subr.mxu0 0.0
    %737 = vmatpush1.msra.mxu0 0.0
    %738 = vmatprep.subr.mxu0 0.0
    %739 = vmatpush1.msra.mxu0 0.0
    %740 = vmatprep.subr.mxu0 0.0
    %741 = vmatpush1.msra.mxu0 0.0
    %742 = vmatprep.subr.mxu0 0.0
    %743 = vmatpush1.msra.mxu0 0.0
    %744 = vmatprep.subr.mxu0 0.0
    %745 = vmatpush1.msra.mxu0 0.0
    %746 = vmatprep.subr.mxu0 0.0
    %747 = vmatpush1.msra.mxu0 0.0
    %748 = vmatprep.subr.mxu0 0.0
    %749 = vmatpush1.msra.mxu0 0.0
    %750 = vmatprep.subr.mxu0 0.0
    %751 = vmatpush1.msra.mxu0 0.0
    %752 = vmatprep.subr.mxu0 0.0
    %753 = vmatpush1.msra.mxu0 0.0
    %754 = vmatprep.subr.mxu0 0.0
    %755 = vmatpush1.msra.mxu0 0.0
    %756 = vmatprep.subr.mxu0 0.0
    %757 = vmatpush1.msra.mxu0 0.0
    %758 = vmatprep.subr.mxu0 0.0
    %759 = vmatpush1.msra.mxu0 %v618
    %760 = vmatprep.subr.mxu0 0.0
    %761 = vmatpush1.msra.mxu0 %v617
    %762 = vmatprep.subr.mxu0 0.0
    %763 = vmatpush1.msra.mxu0 %v616
    %764 = vmatprep.subr.mxu0 0.0
    %765 = vmatpush1.msra.mxu0 %v615
    %766 = vmatprep.subr.mxu0 0.0
    %767 = vmatpush2.msra.mxu0 0.0
    %768 = vmatprep.subr.mxu0 0.0
    %769 = vmatpush2.msra.mxu0 0.0
    %770 = vmatprep.subr.mxu0 0.0
    %771 = vmatpush2.msra.mxu0 0.0
    %772 = vmatprep.subr.mxu0 0.0
    %773 = vmatpush2.msra.mxu0 0.0
    %774 = vmatprep.subr.mxu0 0.0
    %775 = vmatpush2.msra.mxu0 0.0
    %776 = vmatprep.subr.mxu0 0.0
    %777 = vmatpush2.msra.mxu0 0.0
    %778 = vmatprep.subr.mxu0 0.0
    %779 = vmatpush2.msra.mxu0 0.0
    %780 = vmatprep.subr.mxu0 0.0
    %781 = vmatpush2.msra.mxu0 0.0
    %782 = vmatprep.subr.mxu0 0.0
    %783 = vmatpush2.msra.mxu0 0.0
    %784 = vmatprep.subr.mxu0 0.0
    %785 = vmatpush2.msra.mxu0 0.0
    %786 = vmatprep.subr.mxu0 0.0
    %787 = vmatpush2.msra.mxu0 0.0
    %788 = vmatprep.subr.mxu0 0.0
    %789 = vmatpush2.msra.mxu0 0.0
    %790 = vmatprep.subr.mxu0 0.0
    %791 = vmatpush2.msra.mxu0 0.0
    %792 = vmatprep.subr.mxu0 0.0
    %793 = vmatpush2.msra.mxu0 0.0
    %794 = vmatprep.subr.mxu0 0.0
    %795 = vmatpush2.msra.mxu0 0.0
    %796 = vmatprep.subr.mxu0 0.0
    %797 = vmatpush2.msra.mxu0 0.0
    %798 = vmatprep.mubr.f32.mxu0 0.0
    %799 = vmatmul.mubr.f32.gmra.mxu0 %v732
    %v800 = vpop.f32.mrf.mxu0
    %v801 = vadd.f32 %v730, %v800
    %v802 = vpop.f32.mrf.mxu0
    %803 = vdwg.mxu0
    %v804 = vmax.f32 %v801, 0.0
    %v805 = vlaneseq
    %v806 = vshrl.u32 %v805, 7
    %v807 = vsub.s32 3, %v806
    %v808 = vrot.slane %v592, %v807
    %v810 = vsel %vm519, %v804, 0
    %812 = vmatprep.subr.mxu0 0.0
    %813 = vmatpush1.msra.mxu0 0.0
    %814 = vmatprep.subr.mxu0 0.0
    %815 = vmatpush1.msra.mxu0 0.0
    %816 = vmatprep.subr.mxu0 0.0
    %817 = vmatpush1.msra.mxu0 0.0
    %818 = vmatprep.subr.mxu0 0.0
    %819 = vmatpush1.msra.mxu0 0.0
    %820 = vmatprep.subr.mxu0 0.0
    %821 = vmatpush1.msra.mxu0 0.0
    %822 = vmatprep.subr.mxu0 0.0
    %823 = vmatpush1.msra.mxu0 0.0
    %824 = vmatprep.subr.mxu0 0.0
    %825 = vmatpush1.msra.mxu0 0.0
    %826 = vmatprep.subr.mxu0 0.0
    %827 = vmatpush1.msra.mxu0 0.0
    %828 = vmatprep.subr.mxu0 0.0
    %829 = vmatpush1.msra.mxu0 0.0
    %830 = vmatprep.subr.mxu0 0.0
    %831 = vmatpush1.msra.mxu0 0.0
    %832 = vmatprep.subr.mxu0 0.0
    %833 = vmatpush1.msra.mxu0 0.0
    %834 = vmatprep.subr.mxu0 0.0
    %835 = vmatpush1.msra.mxu0 0.0
    %836 = vmatprep.subr.mxu0 0.0
    %837 = vmatpush1.msra.mxu0 0.0
    %838 = vmatprep.subr.mxu0 0.0
    %839 = vmatpush1.msra.mxu0 0.0
    %840 = vmatprep.subr.mxu0 0.0
    %841 = vmatpush1.msra.mxu0 %v620
    %842 = vmatprep.subr.mxu0 0.0
    %843 = vmatpush1.msra.mxu0 %v619
    %844 = vmatprep.subr.mxu0 0.0
    %845 = vmatpush2.msra.mxu0 0.0
    %846 = vmatprep.subr.mxu0 0.0
    %847 = vmatpush2.msra.mxu0 0.0
    %848 = vmatprep.subr.mxu0 0.0
    %849 = vmatpush2.msra.mxu0 0.0
    %850 = vmatprep.subr.mxu0 0.0
    %851 = vmatpush2.msra.mxu0 0.0
    %852 = vmatprep.subr.mxu0 0.0
    %853 = vmatpush2.msra.mxu0 0.0
    %854 = vmatprep.subr.mxu0 0.0
    %855 = vmatpush2.msra.mxu0 0.0
    %856 = vmatprep.subr.mxu0 0.0
    %857 = vmatpush2.msra.mxu0 0.0
    %858 = vmatprep.subr.mxu0 0.0
    %859 = vmatpush2.msra.mxu0 0.0
    %860 = vmatprep.subr.mxu0 0.0
    %861 = vmatpush2.msra.mxu0 0.0
    %862 = vmatprep.subr.mxu0 0.0
    %863 = vmatpush2.msra.mxu0 0.0
    %864 = vmatprep.subr.mxu0 0.0
    %865 = vmatpush2.msra.mxu0 0.0
    %866 = vmatprep.subr.mxu0 0.0
    %867 = vmatpush2.msra.mxu0 0.0
    %868 = vmatprep.subr.mxu0 0.0
    %869 = vmatpush2.msra.mxu0 0.0
    %870 = vmatprep.subr.mxu0 0.0
    %871 = vmatpush2.msra.mxu0 0.0
    %872 = vmatprep.subr.mxu0 0.0
    %873 = vmatpush2.msra.mxu0 0.0
    %874 = vmatprep.subr.mxu0 0.0
    %875 = vmatpush2.msra.mxu0 0.0
    %876 = vmatprep.mubr.f32.mxu0 0.0
    %877 = vmatmul.mubr.f32.gmra.mxu0 %v810
    %v878 = vpop.f32.mrf.mxu0
    %v879 = vadd.f32 %v808, %v878
    %v880 = vpop.f32.mrf.mxu0
    %881 = vdwg.mxu0
    %v882 = vsub.f32 0.0, %v879
    %v883 = vmul.f32 %v882, 1.442695
    %v884 = vpow.pop %v883
    %v885 = vadd.f32 %v884, 1.0
    %v886 = vrcp.pop %v885
    %v887 = vmul.f32 1.0, %v886
    %888 = vst [vmem:[#allocation5] sm:$0xff] %v887
    // Predicated region
    $region26: #{tpu_custom_call.1} parent=1 // pred_check
      _
    $region27: #{tpu_custom_call.1} parent=1 // pred_check_branch
      %890 = sbr.rel (0) target = $region29
    $region28: #{tpu_custom_call.1} parent=1 // pred_region
      %s892 = ssub.s32 128, 128
      %893 = vsyncadd [#allocation4], %s892
      %s895 = sshll.u32 [#allocation5], 4
      %s896 = int_to_ptr.vmem [resolvable:$true] %s895
      %898 = dma.vmem_to_hbm [thread:$0]  %s896, 128, %s5, [#allocation4]
    $region29: #{tpu_custom_call.1} parent=1 // pred_fallthru
      _
    // Predicated region
    $region30: #{tpu_custom_call.1} parent=1 // pred_check
      _
    $region31: #{tpu_custom_call.1} parent=1 // pred_check_branch
      %900 = sbr.rel (0) target = $region33
    $region32: #{tpu_custom_call.1} parent=1 // pred_region
      %901 = dma.done [#allocation4], 128
    $region33: #{tpu_custom_call.1} parent=1 // pred_fallthru
      _
    %902 = vsyncpa [#allocation3], 1
    %903 = vsyncpa [#allocation4], 1

</llo_original>
